<compile_context>
chip_gen: v7x
topology: tpu7x:2x2x1
jax: 0.10.0
libtpu: 0.0.40
codegen_flags: <defaults>
</compile_context>

<pallas_src>
import jax
import jax.numpy as jnp
from jax import lax
from jax.experimental import pallas as pl
from jax.experimental.pallas import tpu as pltpu

_LANES = 128                        # vreg lane width
_SUBLANES = 8                       # vreg sublane depth
_TILE_BYTES = 4 * 1024 * 1024       # per-input, per-buffer VMEM tile budget
_TARGET_INNER_STEPS = 4             # keep the DMA pipeline busy
_PALLAS_MIN_BATCH = 64 * 1024       # below this, fused JAX wins
_VMEM_LIMIT_BYTES = 32 * 1024 * 1024


def _round_up(x: int, m: int) -> int:
    return ((x + m - 1) // m) * m


def _tensorcores_per_chip() -> int:
    """2 on multi-TensorCore parts (v7x); 1 otherwise (v5e / v6e)."""
    try:
        kind = jax.devices()[0].device_kind.lower()
    except Exception:
        return 1
    return 2 if ("v7" in kind or "7x" in kind) else 1


def _make_loss_kernel(tile_rows: int, tiles_per_chunk: int, total_rows: int,
                      needs_mask: bool):
    groups = tile_rows // _SUBLANES

    def kernel(out_ref, tgt_ref, psum_ref):
        c = pl.program_id(0)
        i = pl.program_id(1)

        # psum_ref is this chunk's (8, 128) f32 output block; it stays resident
        # in VMEM across the inner ("arbitrary") reduction axis.
        @pl.when(i == 0)
        def _init():
            psum_ref[...] = jnp.zeros_like(psum_ref)

        # Native-dtype sub/abs (bf16 stays packed on v6e/v7x); widen at the fold.
        diff = jnp.abs(tgt_ref[...] - out_ref[...])

        def _accumulate(d):
            # Fold (tile_rows, 128) onto the (8, 128) accumulator with pure VPU
            # adds; the reshape only regroups whole (8, 128) vreg tiles.
            psum_ref[...] += jnp.sum(
                d.astype(jnp.float32).reshape(groups, _SUBLANES, _LANES), axis=0)

        if not needs_mask:
            _accumulate(diff)
        else:
            row_start = (c * tiles_per_chunk + i) * tile_rows
            in_bounds = row_start + tile_rows <= total_rows

            @pl.when(in_bounds)
            def _full_tile():
                _accumulate(diff)

            @pl.when(jnp.logical_not(in_bounds))
            def _tail_tile():
                # Pallas does NOT auto-mask partial blocks: rows past the true
                # extent contain garbage, so zero them before accumulating.
                row = row_start + lax.broadcasted_iota(
                    jnp.int32, (tile_rows, _LANES), 0)
                _accumulate(jnp.where(row < total_rows, diff,
                                      jnp.zeros_like(diff)))

    return kernel


def custom_loss(outputs: jax.Array, targets: jax.Array, *,
                use_pallas=None) -> jax.Array:
    """Pallas equivalent of CustomLoss.forward.

    outputs: (B, 1) or (B,) per-sample model outputs; targets: (B,).
    Returns scalar f32: mean over the batch of |target_i - output_i|.
    """
    batch = int(outputs.shape[0])
    if batch == 0:
        # Matches the PyTorch branch: empty sum is 0.0, no division.
        return jnp.float32(0.0)

    o = outputs.reshape(batch)      # squeeze — free, keeps the native dtype
    t = targets.reshape(batch)

    if use_pallas is None:
        use_pallas = batch >= _PALLAS_MIN_BATCH
    if (not use_pallas) or batch < _SUBLANES * _LANES:
        # Tiny batches: let XLA fuse mean(abs(.)) into the producer of outputs.
        diff = jnp.abs(t - o).astype(jnp.float32)
        return jnp.sum(diff) / jnp.float32(batch)

    # ---- lane-dense (rows, 128) view --------------------------------------
    rows = pl.cdiv(batch, _LANES)
    lane_padded = rows * _LANES
    if lane_padded != batch:
        # TODO(synk): this <=127-element zero pad still costs one extra HBM
        # pass of both inputs when B % 128 != 0; a fully zero-copy path would
        # need manual 1-D HBM DMA. When B % 128 == 0 no pad happens and the
        # reshape below is a free bitcast.
        o = jnp.pad(o, (0, lane_padded - batch))
        t = jnp.pad(t, (0, lane_padded - batch))
    o2 = o.reshape(rows, _LANES)
    t2 = t.reshape(rows, _LANES)

    # ---- grid / tile sizing ------------------------------------------------
    num_chunks = 2 if (_tensorcores_per_chip() >= 2 and
                       rows >= 2 * _TARGET_INNER_STEPS * _SUBLANES) else 1
    itemsize = max(o2.dtype.itemsize, t2.dtype.itemsize)
    max_tile_rows = max(
        _SUBLANES,
        (_TILE_BYTES // (_LANES * itemsize)) // _SUBLANES * _SUBLANES)
    rows_per_chunk = pl.cdiv(rows, num_chunks)
    tile_rows = min(
        max_tile_rows,
        _round_up(pl.cdiv(rows_per_chunk, _TARGET_INNER_STEPS), _SUBLANES))
    tiles_per_chunk = pl.cdiv(rows_per_chunk, tile_rows)
    needs_mask = (num_chunks * tiles_per_chunk * tile_rows) != rows

    kernel = _make_loss_kernel(tile_rows, tiles_per_chunk, rows, needs_mask)
    in_map = lambda c, i: (c * tiles_per_chunk + i, 0)
    out_map = lambda c, i: (c, 0)   # resident accumulator across the inner axis
    dim_sems = ((pltpu.CORE_PARALLEL if num_chunks == 2 else pltpu.ARBITRARY),
                pltpu.ARBITRARY)

    partials = pl.pallas_call(
        kernel,
        out_shape=jax.ShapeDtypeStruct((num_chunks * _SUBLANES, _LANES),
                                       jnp.float32),
        grid_spec=pltpu.PrefetchScalarGridSpec(
            num_scalar_prefetch=0,
            grid=(num_chunks, tiles_per_chunk),
            in_specs=[
                pl.BlockSpec((tile_rows, _LANES), in_map),
                pl.BlockSpec((tile_rows, _LANES), in_map),
            ],
            out_specs=pl.BlockSpec((_SUBLANES, _LANES), out_map),
        ),
        compiler_params=pltpu.CompilerParams(
            dimension_semantics=dim_sems,
            vmem_limit_bytes=_VMEM_LIMIT_BYTES),
        cost_estimate=pl.CostEstimate(
            flops=3 * rows * _LANES,
            transcendentals=0,
            bytes_accessed=(o2.size * o2.dtype.itemsize
                            + t2.size * t2.dtype.itemsize
                            + num_chunks * _SUBLANES * _LANES * 4)),
    )(o2, t2)

    # Tiny final cross-lane reduce + division by the *true* batch size in JAX.
    return jnp.sum(partials) / jnp.float32(batch)


if __name__ == "__main__":
    key = jax.random.PRNGKey(0)
    k1, k2, k3, k4, k5, k6, k7, k8 = jax.random.split(key, 8)

    def ref_loss(outputs, targets):
        b = outputs.shape[0]
        d = jnp.abs(targets - outputs.reshape(b)).astype(jnp.float32)
        return jnp.sum(d) / jnp.float32(b)

    # 1) Tiny batch, shapes as the module sees them: (B, 1) outputs, (B,)
    #    targets. Auto-dispatch takes the fused-JAX path.
    B1 = 8
    out1 = jax.random.normal(k1, (B1, 1), jnp.float32)
    tgt1 = jax.random.normal(k2, (B1,), jnp.float32)
    l1 = jax.block_until_ready(custom_loss(out1, tgt1))
    assert jnp.allclose(l1, ref_loss(out1, tgt1), rtol=1e-6, atol=1e-6), l1

    # 2) Larger bf16 batch, multiple of 128: zero-copy (no pad), unmasked fast
    #    path, native-dtype (bf16) reads with in-kernel f32 accumulation.
    B2 = 131_072
    out2 = jax.random.normal(k3, (B2, 1), jnp.float32).astype(jnp.bfloat16)
    tgt2 = jax.random.normal(k4, (B2,), jnp.float32).astype(jnp.bfloat16)
    l2 = jax.block_until_ready(custom_loss(out2, tgt2))
    assert jnp.allclose(l2, ref_loss(out2, tgt2), rtol=1e-4, atol=1e-5), l2

    # 3) f32 batch that is not a multiple of 128: <=127-element lane pad plus
    #    in-kernel masking of the partial last tile.
    B3 = 50_000
    out3 = jax.random.normal(k5, (B3, 1), jnp.float32)
    tgt3 = jax.random.normal(k6, (B3,), jnp.float32)
    l3 = jax.block_until_ready(custom_loss(out3, tgt3, use_pallas=True))
    assert jnp.allclose(l3, ref_loss(out3, tgt3), rtol=1e-5, atol=1e-6), l3

    # 4) Multiple of 128 but rows not a multiple of the tile: masked, no pad.
    B4 = 1_280
    out4 = jax.random.normal(k7, (B4, 1), jnp.float32)
    tgt4 = jax.random.normal(k8, (B4,), jnp.float32)
    l4 = jax.block_until_ready(custom_loss(out4, tgt4, use_pallas=True))
    assert jnp.allclose(l4, ref_loss(out4, tgt4), rtol=1e-5, atol=1e-6), l4

    print("KERNEL_OK")
</pallas_src>

<mosaic_0001>
module attributes {stable_mosaic.version = 11 : i64} {
  func.func @kernel(%arg0: i32, %arg1: i32, %arg2: memref<256x128xbf16, #tpu.memory_space<vmem>>, %arg3: memref<256x128xbf16, #tpu.memory_space<vmem>>, %arg4: memref<8x128xf32, #tpu.memory_space<vmem>>) attributes {dimension_semantics = [#tpu.dimension_semantics<arbitrary>, #tpu.dimension_semantics<arbitrary>], iteration_bounds = array<i64: 1, 4>, scalar_prefetch = 0 : i64, scratch_operands = 0 : i64, tpu.core_type = #tpu.core_type<tc>, window_params = [{transform_indices = @transform_0, window_bounds = array<i64: 256, 128>}, {transform_indices = @transform_1, window_bounds = array<i64: 256, 128>}, {transform_indices = @transform_2, window_bounds = array<i64: 8, 128>}]} {
    %c0_i32 = arith.constant 0 : i32
    %0 = arith.cmpi eq, %arg1, %c0_i32 : i32
    %1 = arith.extui %0 : i1 to i32
    %c0_i32_0 = arith.constant 0 : i32
    %2 = arith.cmpi ne, %1, %c0_i32_0 : i32
    scf.if %2 {
      %cst_8 = arith.constant 0.000000e+00 : f32
      %13 = vector.broadcast %cst_8 : f32 to vector<8x128xf32>
      %c0_9 = arith.constant 0 : index
      %c0_10 = arith.constant 0 : index
      %14 = vector.load %arg4[%c0_9, %c0_10] : memref<8x128xf32, #tpu.memory_space<vmem>>, vector<8x128xf32>
      tpu.vector_store %arg4[%c0_9, %c0_10], %13 {strides = array<i32>} : memref<8x128xf32, #tpu.memory_space<vmem>>, vector<8x128xf32>,
    } else {
    }
    %c0 = arith.constant 0 : index
    %c0_1 = arith.constant 0 : index
    %3 = vector.load %arg3[%c0, %c0_1] : memref<256x128xbf16, #tpu.memory_space<vmem>>, vector<256x128xbf16>
    %c0_2 = arith.constant 0 : index
    %c0_3 = arith.constant 0 : index
    %4 = vector.load %arg2[%c0_2, %c0_3] : memref<256x128xbf16, #tpu.memory_space<vmem>>, vector<256x128xbf16>
    %5 = arith.subf %3, %4 : vector<256x128xbf16>
    %6 = math.absf %5 : vector<256x128xbf16>
    %c0_4 = arith.constant 0 : index
    %c0_5 = arith.constant 0 : index
    %7 = vector.load %arg4[%c0_4, %c0_5] : memref<8x128xf32, #tpu.memory_space<vmem>>, vector<8x128xf32>
    %8 = arith.extf %6 : vector<256x128xbf16> to vector<256x128xf32>
    %9 = vector.shape_cast %8 : vector<256x128xf32> to vector<32x8x128xf32>
    %cst = arith.constant dense<0.000000e+00> : vector<8x128xf32>
    %10 = vector.multi_reduction <add>, %9, %cst [0] : vector<32x8x128xf32> to vector<8x128xf32>
    %11 = arith.addf %7, %10 : vector<8x128xf32>
    %c0_6 = arith.constant 0 : index
    %c0_7 = arith.constant 0 : index
    %12 = vector.load %arg4[%c0_6, %c0_7] : memref<8x128xf32, #tpu.memory_space<vmem>>, vector<8x128xf32>
    tpu.vector_store %arg4[%c0_6, %c0_7], %11 {strides = array<i32>} : memref<8x128xf32, #tpu.memory_space<vmem>>, vector<8x128xf32>,
    return
  }
  func.func @transform_0(%arg0: i32, %arg1: i32) -> (i32, i32) {
    %c4_i32 = arith.constant 4 : i32
    %0 = arith.muli %arg0, %c4_i32 : i32
    %1 = arith.addi %0, %arg1 : i32
    %c0_i32 = arith.constant 0 : i32
    %c0_i32_0 = arith.constant 0 : i32
    return %1, %c0_i32 : i32, i32
  }
  func.func @transform_1(%arg0: i32, %arg1: i32) -> (i32, i32) {
    %c4_i32 = arith.constant 4 : i32
    %0 = arith.muli %arg0, %c4_i32 : i32
    %1 = arith.addi %0, %arg1 : i32
    %c0_i32 = arith.constant 0 : i32
    %c0_i32_0 = arith.constant 0 : i32
    return %1, %c0_i32 : i32, i32
  }
  func.func @transform_2(%arg0: i32, %arg1: i32) -> (i32, i32) {
    %c0_i32 = arith.constant 0 : i32
    %c0_i32_0 = arith.constant 0 : i32
    return %arg0, %c0_i32 : i32, i32
  }
}

</mosaic_0001>

<llo_original>
// kernel: tpu_custom_call.1
$region0: #{tpu_custom_call.1}
  #allocation0 [shape = 'u32[]', space=smem, size = 0x4, offset = 0x4, fixed_abs, tag = 'smem constant byte address 0x4 - core index']
  #allocation1 [shape = 'u32[144,128]{1,0:T(1,128)}', space=vmem, size = 0x12000, scoped, tag = 'internal scratch']
  %s0 = inlined_call_operand.hbm [shape: bf16[1024,128], index: 0, kind: input, shape index: {}]
  %s1 = inlined_call_operand.hbm [shape: bf16[1024,128], index: 1, kind: input, shape index: {}]
  %s2 = inlined_call_operand.hbm [shape: f32[8,128], index: 2, kind: output, shape index: {}]
  %s3 = sld [smem:[#allocation0]]
  $region53: #{tpu_custom_call.1} parent=0
    _
  %s5 = ssub.s32 1, %s3
  %s6 = scalar_select 0, %s5, %s3
  $region1: #{tpu_custom_call.1} parent=0
    #allocation2 [shape = 'u8[131072]{0}', space=vmem, size = 0x20000, scoped, tag = 'input window, operand 0']
    #allocation3 [shape = 's32[2]{0}', space=sflag, size = 0x8, scoped, tag = 'scoped memory for tpu_custom_call.1']
    #allocation4 [shape = 's32[2]{0}', space=sflag, size = 0x8, scoped, tag = 'scoped memory for tpu_custom_call.1']
    #allocation5 [shape = 'u8[131072]{0}', space=vmem, size = 0x20000, scoped, tag = 'input window, operand 1']
    #allocation6 [shape = 's32[2]{0}', space=sflag, size = 0x8, scoped, tag = 'scoped memory for tpu_custom_call.1']
    #allocation7 [shape = 'u8[4096]{0}', space=vmem, size = 0x1000, scoped, tag = 'output window, operand 0, single buffered']
    %7 = vsyncpa [#allocation3], 0
    %s8 = scalar_lea.sflag [#allocation3], 1
    %9 = vsyncpa %s8, 0
    %10 = vsyncpa [#allocation6], 0
    %s11 = scalar_lea.sflag [#allocation6], 1
    %12 = vsyncpa %s11, 0
    %13 = vsyncpa [#allocation4], 0
    loop: start=0, step=1, limit=6
    $region2: #{tpu_custom_call.1} parent=1 // loop_pre_header
      _
    $region3: #{tpu_custom_call.1} parent=1 // loop_header
      %s15 = sphi 0, %s19
      %p16 = scmp.ge.s32.totalorder %s15, 6
      %s22 = sphi 0, %s34
      %s23 = sphi 0, %s30
      %s24 = sphi 0, %s22
      %s25 = sphi 0, %s23
      %s26 = sphi 0, %s24
      %s27 = sphi 0, %s25
      %s41 = sphi 0, %s43
      %s44 = sphi 0, %s41
      %s45 = sphi 0, %s44
      %s61 = sphi 0, %s45
      %s71 = sphi 0, %s73
      %s74 = sphi 0, %s71
      %s75 = sphi 0, %s74
      %s91 = sphi 0, %s75
      %s97 = sphi 0, %s99
      %s100 = sphi 0, %s97
      %s101 = sphi 0, %s100
      %s117 = sphi 0, %s101
    $region4: #{tpu_custom_call.1} parent=1 // loop_header_branch
      %18 = sbr.rel (%p16) target = $region8
    $region5: #{tpu_custom_call.1} parent=1 // loop_body
      %s20 = ssub.s32 %s15, 1
      %s21 = ssub.s32 %s15, 2
      %s28 = sadd.s32 1, %s23
      %p29 = scmp.ge.s32.totalorder %s28, 4
      %s30 = scalar_select %p29, 0, %s28
      %s31 = sadd.s32 1, %s22
      %s32 = scalar_select %p29, %s31, %s22
      %p33 = scmp.ge.s32.totalorder %s32, 1
      %s34 = scalar_select %p33, 0, %s32
      %s35 = smul.u32 %s22, 4
      %s36 = sadd.s32 %s35, %s23
      %s37 = smul.u32 %s34, 4
      %s38 = sadd.s32 %s37, %s30
      %s39 = ssub.s32 %s36, %s38
      %p40 = scmp.eq.s32.totalorder %s39, 0
      %s42 = sadd.s32 %s41, 1
      %s43 = scalar_select %p40, %s41, %s42
      %p46 = pneg %p40
      %p47 = scmp.eq.s32.totalorder %s15, 3
      %p48 = por %p46, %p47
      %p49 = scmp.ne.s32.totalorder %s41, %s44
      %p50 = scmp.eq.s32.totalorder %s15, 0
      %p51 = por %p49, %p50
      %p52 = scmp.ne.s32.totalorder %s41, %s44
      %p53 = scmp.eq.s32.totalorder %s20, 3
      %p54 = por %p52, %p53
      %p55 = scmp.ne.s32.totalorder %s44, %s45
      %p56 = scmp.eq.s32.totalorder %s20, 0
      %p57 = por %p55, %p56
      %p58 = scmp.ne.s32.totalorder %s44, %s45
      %p59 = scmp.eq.s32.totalorder %s21, 3
      %p60 = por %p58, %p59
      %p62 = scmp.ne.s32.totalorder %s45, %s61
      %p63 = scmp.eq.s32.totalorder %s21, 0
      %p64 = por %p62, %p63
      %s65 = smul.u32 %s22, 4
      %s66 = sadd.s32 %s65, %s23
      %s67 = smul.u32 %s34, 4
      %s68 = sadd.s32 %s67, %s30
      %s69 = ssub.s32 %s66, %s68
      %p70 = scmp.eq.s32.totalorder %s69, 0
      %s72 = sadd.s32 %s71, 1
      %s73 = scalar_select %p70, %s71, %s72
      %p76 = pneg %p70
      %p77 = scmp.eq.s32.totalorder %s15, 3
      %p78 = por %p76, %p77
      %p79 = scmp.ne.s32.totalorder %s71, %s74
      %p80 = scmp.eq.s32.totalorder %s15, 0
      %p81 = por %p79, %p80
      %p82 = scmp.ne.s32.totalorder %s71, %s74
      %p83 = scmp.eq.s32.totalorder %s20, 3
      %p84 = por %p82, %p83
      %p85 = scmp.ne.s32.totalorder %s74, %s75
      %p86 = scmp.eq.s32.totalorder %s20, 0
      %p87 = por %p85, %p86
      %p88 = scmp.ne.s32.totalorder %s74, %s75
      %p89 = scmp.eq.s32.totalorder %s21, 3
      %p90 = por %p88, %p89
      %p92 = scmp.ne.s32.totalorder %s75, %s91
      %p93 = scmp.eq.s32.totalorder %s21, 0
      %p94 = por %p92, %p93
      %s95 = ssub.s32 %s22, %s34
      %p96 = scmp.eq.s32.totalorder %s95, 0
      %s98 = sadd.s32 %s97, 1
      %s99 = scalar_select %p96, %s97, %s98
      %p102 = pneg %p96
      %p103 = scmp.eq.s32.totalorder %s15, 3
      %p104 = por %p102, %p103
      %p105 = scmp.ne.s32.totalorder %s97, %s100
      %p106 = scmp.eq.s32.totalorder %s15, 0
      %p107 = por %p105, %p106
      %p108 = scmp.ne.s32.totalorder %s97, %s100
      %p109 = scmp.eq.s32.totalorder %s20, 3
      %p110 = por %p108, %p109
      %p111 = scmp.ne.s32.totalorder %s100, %s101
      %p112 = scmp.eq.s32.totalorder %s20, 0
      %p113 = por %p111, %p112
      %p114 = scmp.ne.s32.totalorder %s100, %s101
      %p115 = scmp.eq.s32.totalorder %s21, 3
      %p116 = por %p114, %p115
      %p118 = scmp.ne.s32.totalorder %s101, %s117
      %p119 = scmp.eq.s32.totalorder %s21, 0
      %p120 = por %p118, %p119
      %p121 = scmp.le.s32.totalorder 1, %s15
      %p122 = scmp.lt.s32.totalorder %s15, 5
      %p123 = pnand %p121, %p122
      %p124 = pneg %p123
      // Predicated region
      $region9: #{tpu_custom_call.1} parent=5 // pred_check
        _
      $region10: #{tpu_custom_call.1} parent=5 // pred_check_branch
        %126 = sbr.rel (%p123) target = $region12
      $region11: #{tpu_custom_call.1} parent=5 // pred_region
        %s127 = ssub.s32 %s15, 1
      $region12: #{tpu_custom_call.1} parent=5 // pred_fallthru
        _
      %p128 = scmp.lt.s32.totalorder %s15, 4
      // Predicated region
      $region13: #{tpu_custom_call.1} parent=5 // pred_check
        %p129 = pneg %p128
      $region14: #{tpu_custom_call.1} parent=5 // pred_check_branch
        %131 = sbr.rel (%p129) target = $region16
      $region15: #{tpu_custom_call.1} parent=5 // pred_region
        // Predicated region
        $region17: #{tpu_custom_call.1} parent=15 // pred_check
          %p132 = pneg %p51
        $region18: #{tpu_custom_call.1} parent=15 // pred_check_branch
          %134 = sbr.rel (%p132) target = $region20
        $region19: #{tpu_custom_call.1} parent=15 // pred_region
          %s135 = sand.u32 %s41, 1
          %s136 = scalar_lea.sflag [#allocation3], %s135
          %s137 = sand.u32 %s41, 1
          %s138 = smul.addr %s137, 128
          %s139 = scalar_lea.vmem [#allocation2], %s138
          %s140 = smul.u32 %s22, 4
          %s141 = sadd.s32 %s140, %s23
          %s142 = smul.u32 32, %s141
          %s144 = ssub.s32 2048, 2048
          %145 = vsyncadd %s136, %s144
          %s146 = smul.addr %s142, 64
          %s147 = scalar_lea.hbm %s0, %s146
          %s148 = sshll.u32 %s139, 4
          %s149 = int_to_ptr.vmem [resolvable:$true] %s148
          %154 = dma.hbm_to_vmem [thread:$0]  %s147, 2048, %s149, %s136, 64, 64, 4
        $region20: #{tpu_custom_call.1} parent=15 // pred_fallthru
          _
        // Predicated region
        $region21: #{tpu_custom_call.1} parent=15 // pred_check
          %p155 = pneg %p81
        $region22: #{tpu_custom_call.1} parent=15 // pred_check_branch
          %157 = sbr.rel (%p155) target = $region24
        $region23: #{tpu_custom_call.1} parent=15 // pred_region
          %s158 = sand.u32 %s71, 1
          %s159 = scalar_lea.sflag [#allocation6], %s158
          %s160 = sand.u32 %s71, 1
          %s161 = smul.addr %s160, 128
          %s162 = scalar_lea.vmem [#allocation5], %s161
          %s163 = smul.u32 %s22, 4
          %s164 = sadd.s32 %s163, %s23
          %s165 = smul.u32 32, %s164
          %s167 = ssub.s32 2048, 2048
          %168 = vsyncadd %s159, %s167
          %s169 = smul.addr %s165, 64
          %s170 = scalar_lea.hbm %s1, %s169
          %s171 = sshll.u32 %s162, 4
          %s172 = int_to_ptr.vmem [resolvable:$true] %s171
          %177 = dma.hbm_to_vmem [thread:$0]  %s170, 2048, %s172, %s159, 64, 64, 4
        $region24: #{tpu_custom_call.1} parent=15 // pred_fallthru
          _
      $region16: #{tpu_custom_call.1} parent=5 // pred_fallthru
        _
      %p178 = scmp.le.s32.totalorder 1, %s15
      %p179 = scmp.lt.s32.totalorder %s15, 5
      %p180 = pnand %p178, %p179
      %p181 = pneg %p180
      // Predicated region
      $region25: #{tpu_custom_call.1} parent=5 // pred_check
        _
      $region26: #{tpu_custom_call.1} parent=5 // pred_check_branch
        %183 = sbr.rel (%p180) target = $region28
      $region27: #{tpu_custom_call.1} parent=5 // pred_region
        %s184 = ssub.s32 %s15, 1
        %s185 = sand.u32 %s44, 1
        %s186 = scalar_lea.sflag [#allocation3], %s185
        %s187 = sand.u32 %s44, 1
        %s188 = smul.addr %s187, 128
        %s189 = scalar_lea.vmem [#allocation2], %s188
        // Predicated region
        $region29: #{tpu_custom_call.1} parent=27 // pred_check
          %p190 = pneg %p57
        $region30: #{tpu_custom_call.1} parent=27 // pred_check_branch
          %192 = sbr.rel (%p190) target = $region32
        $region31: #{tpu_custom_call.1} parent=27 // pred_region
          %193 = dma.done %s186, 2048
        $region32: #{tpu_custom_call.1} parent=27 // pred_fallthru
          _
        %s194 = sand.u32 %s74, 1
        %s195 = scalar_lea.sflag [#allocation6], %s194
        %s196 = sand.u32 %s74, 1
        %s197 = smul.addr %s196, 128
        %s198 = scalar_lea.vmem [#allocation5], %s197
        // Predicated region
        $region33: #{tpu_custom_call.1} parent=27 // pred_check
          %p199 = pneg %p87
        $region34: #{tpu_custom_call.1} parent=27 // pred_check_branch
          %201 = sbr.rel (%p199) target = $region36
        $region35: #{tpu_custom_call.1} parent=27 // pred_region
          %202 = dma.done %s195, 2048
        $region36: #{tpu_custom_call.1} parent=27 // pred_fallthru
          _
        %s203 = sand.u32 %s44, 1
        %s204 = scalar_lea.sflag [#allocation3], %s203
        %s205 = sand.u32 %s44, 1
        %s206 = smul.addr %s205, 128
        %s207 = scalar_lea.vmem [#allocation2], %s206
        %p208 = pneg %p57
        %p209 = pneg %p54
        %s210 = sand.u32 %s74, 1
        %s211 = scalar_lea.sflag [#allocation6], %s210
        %s212 = sand.u32 %s74, 1
        %s213 = smul.addr %s212, 128
        %s214 = scalar_lea.vmem [#allocation5], %s213
        %p215 = pneg %p87
        %p216 = pneg %p84
        %p217 = pneg %p113
        %p218 = pneg %p110
        %s219 = smul.u32 %s24, 4
        %s220 = sadd.s32 %s219, %s25
        %s221 = smul.u32 32, %s220
        %s222 = smul.u32 %s24, 4
        %s223 = sadd.s32 %s222, %s25
        %s224 = smul.u32 32, %s223
        %p225 = scmp.eq.s32.totalorder %s25, 0
        // Predicated region
        $region37: #{tpu_custom_call.1} parent=27 // pred_check
          %p226 = pneg %p225
        $region38: #{tpu_custom_call.1} parent=27 // pred_check_branch
          %228 = sbr.rel (%p226) target = $region40
        $region39: #{tpu_custom_call.1} parent=27 // pred_region
          %229 = vst [vmem:[#allocation7] sm:$0xff] 0.0
        $region40: #{tpu_custom_call.1} parent=27 // pred_fallthru
          _
        %v230 = vld [vmem:[%s198] sm:$0xf]
        %v231 = vld [vmem:[%s198 + $0x4] sm:$0xf]
        %v232 = vld [vmem:[%s198 + $0x8] sm:$0xf]
        %v233 = vld [vmem:[%s198 + $0xc] sm:$0xf]
        %v234 = vld [vmem:[%s198 + $0x10] sm:$0xf]
        %v235 = vld [vmem:[%s198 + $0x14] sm:$0xf]
        %v236 = vld [vmem:[%s198 + $0x18] sm:$0xf]
        %v237 = vld [vmem:[%s198 + $0x1c] sm:$0xf]
        %v238 = vld [vmem:[%s198 + $0x20] sm:$0xf]
        %v239 = vld [vmem:[%s198 + $0x24] sm:$0xf]
        %v240 = vld [vmem:[%s198 + $0x28] sm:$0xf]
        %v241 = vld [vmem:[%s198 + $0x2c] sm:$0xf]
        %v242 = vld [vmem:[%s198 + $0x30] sm:$0xf]
        %v243 = vld [vmem:[%s198 + $0x34] sm:$0xf]
        %v244 = vld [vmem:[%s198 + $0x38] sm:$0xf]
        %v245 = vld [vmem:[%s198 + $0x3c] sm:$0xf]
        %v246 = vld [vmem:[%s198 + $0x40] sm:$0xf]
        %v247 = vld [vmem:[%s198 + $0x44] sm:$0xf]
        %v248 = vld [vmem:[%s198 + $0x48] sm:$0xf]
        %v249 = vld [vmem:[%s198 + $0x4c] sm:$0xf]
        %v250 = vld [vmem:[%s198 + $0x50] sm:$0xf]
        %v251 = vld [vmem:[%s198 + $0x54] sm:$0xf]
        %v252 = vld [vmem:[%s198 + $0x58] sm:$0xf]
        %v253 = vld [vmem:[%s198 + $0x5c] sm:$0xf]
        %v254 = vld [vmem:[%s198 + $0x60] sm:$0xf]
        %v255 = vld [vmem:[%s198 + $0x64] sm:$0xf]
        %v256 = vld [vmem:[%s198 + $0x68] sm:$0xf]
        %v257 = vld [vmem:[%s198 + $0x6c] sm:$0xf]
        %v258 = vld [vmem:[%s198 + $0x70] sm:$0xf]
        %v259 = vld [vmem:[%s198 + $0x74] sm:$0xf]
        %v260 = vld [vmem:[%s198 + $0x78] sm:$0xf]
        %v261 = vld [vmem:[%s198 + $0x7c] sm:$0xf]
        %v262 = vld [vmem:[%s189] sm:$0xf]
        %v263 = vld [vmem:[%s189 + $0x4] sm:$0xf]
        %v264 = vld [vmem:[%s189 + $0x8] sm:$0xf]
        %v265 = vld [vmem:[%s189 + $0xc] sm:$0xf]
        %v266 = vld [vmem:[%s189 + $0x10] sm:$0xf]
        %v267 = vld [vmem:[%s189 + $0x14] sm:$0xf]
        %v268 = vld [vmem:[%s189 + $0x18] sm:$0xf]
        %v269 = vld [vmem:[%s189 + $0x1c] sm:$0xf]
        %v270 = vld [vmem:[%s189 + $0x20] sm:$0xf]
        %v271 = vld [vmem:[%s189 + $0x24] sm:$0xf]
        %v272 = vld [vmem:[%s189 + $0x28] sm:$0xf]
        %v273 = vld [vmem:[%s189 + $0x2c] sm:$0xf]
        %v274 = vld [vmem:[%s189 + $0x30] sm:$0xf]
        %v275 = vld [vmem:[%s189 + $0x34] sm:$0xf]
        %v276 = vld [vmem:[%s189 + $0x38] sm:$0xf]
        %v277 = vld [vmem:[%s189 + $0x3c] sm:$0xf]
        %v278 = vld [vmem:[%s189 + $0x40] sm:$0xf]
        %v279 = vld [vmem:[%s189 + $0x44] sm:$0xf]
        %v280 = vld [vmem:[%s189 + $0x48] sm:$0xf]
        %v281 = vld [vmem:[%s189 + $0x4c] sm:$0xf]
        %v282 = vld [vmem:[%s189 + $0x50] sm:$0xf]
        %v283 = vld [vmem:[%s189 + $0x54] sm:$0xf]
        %v284 = vld [vmem:[%s189 + $0x58] sm:$0xf]
        %v285 = vld [vmem:[%s189 + $0x5c] sm:$0xf]
        %v286 = vld [vmem:[%s189 + $0x60] sm:$0xf]
        %v287 = vld [vmem:[%s189 + $0x64] sm:$0xf]
        %v288 = vld [vmem:[%s189 + $0x68] sm:$0xf]
        %v289 = vld [vmem:[%s189 + $0x6c] sm:$0xf]
        %v290 = vld [vmem:[%s189 + $0x70] sm:$0xf]
        %v291 = vld [vmem:[%s189 + $0x74] sm:$0xf]
        %v292 = vld [vmem:[%s189 + $0x78] sm:$0xf]
        %v293 = vld [vmem:[%s189 + $0x7c] sm:$0xf]
        %v294 = vsub.bf16 %v230, %v262
        %v295 = vsub.bf16 %v231, %v263
        %v296 = vsub.bf16 %v232, %v264
        %v297 = vsub.bf16 %v233, %v265
        %v298 = vsub.bf16 %v234, %v266
        %v299 = vsub.bf16 %v235, %v267
        %v300 = vsub.bf16 %v236, %v268
        %v301 = vsub.bf16 %v237, %v269
        %v302 = vsub.bf16 %v238, %v270
        %v303 = vsub.bf16 %v239, %v271
        %v304 = vsub.bf16 %v240, %v272
        %v305 = vsub.bf16 %v241, %v273
        %v306 = vsub.bf16 %v242, %v274
        %v307 = vsub.bf16 %v243, %v275
        %v308 = vsub.bf16 %v244, %v276
        %v309 = vsub.bf16 %v245, %v277
        %v310 = vsub.bf16 %v246, %v278
        %v311 = vsub.bf16 %v247, %v279
        %v312 = vsub.bf16 %v248, %v280
        %v313 = vsub.bf16 %v249, %v281
        %v314 = vsub.bf16 %v250, %v282
        %v315 = vsub.bf16 %v251, %v283
        %v316 = vsub.bf16 %v252, %v284
        %v317 = vsub.bf16 %v253, %v285
        %v318 = vsub.bf16 %v254, %v286
        %v319 = vsub.bf16 %v255, %v287
        %v320 = vsub.bf16 %v256, %v288
        %v321 = vsub.bf16 %v257, %v289
        %v322 = vsub.bf16 %v258, %v290
        %v323 = vsub.bf16 %v259, %v291
        %v324 = vsub.bf16 %v260, %v292
        %v325 = vsub.bf16 %v261, %v293
        %v326 = vand.u32 2147450879, %v294
        %v327 = vand.u32 2147450879, %v295
        %v328 = vand.u32 2147450879, %v296
        %v329 = vand.u32 2147450879, %v297
        %v330 = vand.u32 2147450879, %v298
        %v331 = vand.u32 2147450879, %v299
        %v332 = vand.u32 2147450879, %v300
        %v333 = vand.u32 2147450879, %v301
        %v334 = vand.u32 2147450879, %v302
        %v335 = vand.u32 2147450879, %v303
        %v336 = vand.u32 2147450879, %v304
        %v337 = vand.u32 2147450879, %v305
        %v338 = vand.u32 2147450879, %v306
        %v339 = vand.u32 2147450879, %v307
        %v340 = vand.u32 2147450879, %v308
        %v341 = vand.u32 2147450879, %v309
        %v342 = vand.u32 2147450879, %v310
        %v343 = vand.u32 2147450879, %v311
        %v344 = vand.u32 2147450879, %v312
        %v345 = vand.u32 2147450879, %v313
        %v346 = vand.u32 2147450879, %v314
        %v347 = vand.u32 2147450879, %v315
        %v348 = vand.u32 2147450879, %v316
        %v349 = vand.u32 2147450879, %v317
        %v350 = vand.u32 2147450879, %v318
        %v351 = vand.u32 2147450879, %v319
        %v352 = vand.u32 2147450879, %v320
        %v353 = vand.u32 2147450879, %v321
        %v354 = vand.u32 2147450879, %v322
        %v355 = vand.u32 2147450879, %v323
        %v356 = vand.u32 2147450879, %v324
        %v357 = vand.u32 2147450879, %v325
        %v358 = vld [vmem:[#allocation7] sm:$0xff]
        %v359 = vunpack.c.l.bf16 %v326
        %v360 = vunpack.c.l.bf16 %v327
        %v361 = vunpack.c.l.bf16 %v328
        %v362 = vunpack.c.l.bf16 %v329
        %v363 = vunpack.c.l.bf16 %v330
        %v364 = vunpack.c.l.bf16 %v331
        %v365 = vunpack.c.l.bf16 %v332
        %v366 = vunpack.c.l.bf16 %v333
        %v367 = vunpack.c.l.bf16 %v334
        %v368 = vunpack.c.l.bf16 %v335
        %v369 = vunpack.c.l.bf16 %v336
        %v370 = vunpack.c.l.bf16 %v337
        %v371 = vunpack.c.l.bf16 %v338
        %v372 = vunpack.c.l.bf16 %v339
        %v373 = vunpack.c.l.bf16 %v340
        %v374 = vunpack.c.l.bf16 %v341
        %v375 = vunpack.c.l.bf16 %v342
        %v376 = vunpack.c.l.bf16 %v343
        %v377 = vunpack.c.l.bf16 %v344
        %v378 = vunpack.c.l.bf16 %v345
        %v379 = vunpack.c.l.bf16 %v346
        %v380 = vunpack.c.l.bf16 %v347
        %v381 = vunpack.c.l.bf16 %v348
        %v382 = vunpack.c.l.bf16 %v349
        %v383 = vunpack.c.l.bf16 %v350
        %v384 = vunpack.c.l.bf16 %v351
        %v385 = vunpack.c.l.bf16 %v352
        %v386 = vunpack.c.l.bf16 %v353
        %v387 = vunpack.c.l.bf16 %v354
        %v388 = vunpack.c.l.bf16 %v355
        %v389 = vunpack.c.l.bf16 %v356
        %v390 = vunpack.c.l.bf16 %v357
        %v391 = vadd.f32 %v359, %v360
        %v392 = vadd.f32 %v391, %v361
        %v393 = vadd.f32 %v392, %v362
        %v394 = vadd.f32 %v393, %v363
        %v395 = vadd.f32 %v394, %v364
        %v396 = vadd.f32 %v395, %v365
        %v397 = vadd.f32 %v396, %v366
        %v398 = vadd.f32 %v397, %v367
        %v399 = vadd.f32 %v398, %v368
        %v400 = vadd.f32 %v399, %v369
        %v401 = vadd.f32 %v400, %v370
        %v402 = vadd.f32 %v401, %v371
        %v403 = vadd.f32 %v402, %v372
        %v404 = vadd.f32 %v403, %v373
        %v405 = vadd.f32 %v404, %v374
        %v406 = vadd.f32 %v405, %v375
        %v407 = vadd.f32 %v406, %v376
        %v408 = vadd.f32 %v407, %v377
        %v409 = vadd.f32 %v408, %v378
        %v410 = vadd.f32 %v409, %v379
        %v411 = vadd.f32 %v410, %v380
        %v412 = vadd.f32 %v411, %v381
        %v413 = vadd.f32 %v412, %v382
        %v414 = vadd.f32 %v413, %v383
        %v415 = vadd.f32 %v414, %v384
        %v416 = vadd.f32 %v415, %v385
        %v417 = vadd.f32 %v416, %v386
        %v418 = vadd.f32 %v417, %v387
        %v419 = vadd.f32 %v418, %v388
        %v420 = vadd.f32 %v419, %v389
        %v421 = vadd.f32 %v420, %v390
        %v422 = vadd.f32 %v358, %v421
        %423 = vst [vmem:[#allocation7] sm:$0xff] %v422
        // Predicated region
        $region41: #{tpu_custom_call.1} parent=27 // pred_check
          %p424 = pneg %p110
        $region42: #{tpu_custom_call.1} parent=27 // pred_check_branch
          %426 = sbr.rel (%p424) target = $region44
        $region43: #{tpu_custom_call.1} parent=27 // pred_region
          %s428 = ssub.s32 128, 128
          %429 = vsyncadd [#allocation4], %s428
          %s430 = smul.addr %s24, 128
          %s431 = scalar_lea.hbm %s2, %s430
          %s433 = sshll.u32 [#allocation7], 4
          %s434 = int_to_ptr.vmem [resolvable:$true] %s433
          %436 = dma.vmem_to_hbm [thread:$0]  %s434, 128, %s431, [#allocation4]
        $region44: #{tpu_custom_call.1} parent=27 // pred_fallthru
          _
        // Predicated region
        $region45: #{tpu_custom_call.1} parent=27 // pred_check
          %p437 = pneg %p110
        $region46: #{tpu_custom_call.1} parent=27 // pred_check_branch
          %439 = sbr.rel (%p437) target = $region48
        $region47: #{tpu_custom_call.1} parent=27 // pred_region
          %440 = dma.done [#allocation4], 128
        $region48: #{tpu_custom_call.1} parent=27 // pred_fallthru
          _
      $region28: #{tpu_custom_call.1} parent=5 // pred_fallthru
        _
      %p441 = scmp.le.s32.totalorder 2, %s15
      // Predicated region
      $region49: #{tpu_custom_call.1} parent=5 // pred_check
        %p442 = pneg %p441
      $region50: #{tpu_custom_call.1} parent=5 // pred_check_branch
        %444 = sbr.rel (%p442) target = $region52
      $region51: #{tpu_custom_call.1} parent=5 // pred_region
        %s445 = ssub.s32 %s15, 2
      $region52: #{tpu_custom_call.1} parent=5 // pred_fallthru
        _
    $region6: #{tpu_custom_call.1} parent=1 // loop_footer
      %s19 = sadd.s32 1, %s15
    $region7: #{tpu_custom_call.1} parent=1 // loop_footer_branch
      %14 = sbr.rel target = $region3
    $region8: #{tpu_custom_call.1} parent=1 // loop_exit
      _
    %446 = vsyncpa [#allocation3], 1
    %s447 = scalar_lea.sflag [#allocation3], 1
    %448 = vsyncpa %s447, 1
    %449 = vsyncpa [#allocation6], 1
    %s450 = scalar_lea.sflag [#allocation6], 1
    %451 = vsyncpa %s450, 1
    %452 = vsyncpa [#allocation4], 1
    %s453 = scalar_lea.sflag [#allocation4], 1
    %454 = vsyncpa %s453, 1

</llo_original>
